<compile_context>
chip_gen: v5e
topology: v5e:2x2
jax: 0.10.0
libtpu: 0.0.40
codegen_flags: <defaults>
</compile_context>

<pallas_src>
import functools

import jax
import jax.numpy as jnp
from jax.experimental import pallas as pl
from jax.experimental.pallas import tpu as pltpu


def _dropout_double_kernel(seed_ref, x_ref, o_ref, *, p, lanes):
    """out = dropout(x + x, p) for one (TR, LANES) tile."""
    xv = x_ref[...]
    tr = x_ref.shape[0]

    # Global element index of every entry in this tile (tiles are independent,
    # so the grid may legally be sharded "parallel" across TensorCores).
    row = jax.lax.broadcasted_iota(jnp.int32, (tr, lanes), 0)
    col = jax.lax.broadcasted_iota(jnp.int32, (tr, lanes), 1)
    grow = pl.program_id(0) * tr + row
    gidx = (grow * lanes + col).astype(jnp.uint32)

    # Counter-based hash: golden-ratio scramble of (index, seed), then the
    # "lowbias32" finalizer.  Pure 32-bit VPU integer ops, no TPU PRNG state.
    seed = seed_ref[0].astype(jnp.uint32)
    z = gidx * jnp.uint32(0x9E3779B9) + seed * jnp.uint32(0x85EBCA6B) + jnp.uint32(1)
    z = z ^ (z >> 16)
    z = z * jnp.uint32(0x7FEB352D)
    z = z ^ (z >> 15)
    z = z * jnp.uint32(0x846CA68B)
    z = z ^ (z >> 16)

    # keep iff bits >= p * 2^32  (for p=0.5 this is just the top bit).
    threshold = jnp.uint32(min(int(p * (1 << 32)), (1 << 32) - 1))
    keep = z >= threshold

    # Fused (x + x) * 1/(1-p) == x * (2/(1-p)) -> single VPU multiply.
    scale = jnp.asarray(2.0 / (1.0 - p), dtype=xv.dtype)
    o_ref[...] = jnp.where(keep, xv * scale, jnp.zeros_like(xv)).astype(o_ref.dtype)


def _choose_lanes(n):
    """Widest lane count that divides n exactly (no padding), else 128."""
    for lanes in (2048, 1024, 512, 256, 128):
        if n % lanes == 0:
            return lanes
    return 128


def simple_dropout_module(x, seed=0, *, p=0.5, training=True, inplace=False):
    """Pallas equivalent of SimpleDropoutModule.forward.

    `inplace` has no effect on the returned value in PyTorch, so it is
    accepted but ignored.
    """
    del inplace  # TODO(synk): true in-place aliasing not needed for value semantics.

    # Inference / p == 0: pure doubling, no kernel launch needed.
    if not training or p <= 0.0:
        return x + x
    if p >= 1.0:
        return jnp.zeros_like(x)

    orig_shape = x.shape
    n = x.size

    # Lane-dense 2-D slab.
    lanes = _choose_lanes(n)
    xf = x.reshape(-1)
    pad = (-n) % lanes
    if pad:
        xf = jnp.pad(xf, (0, pad))
    rows = xf.size // lanes
    x2 = xf.reshape(rows, lanes)

    # Block rows: target ~2 MiB per block (near HBM roofline, comfortably
    # inside the 32 MiB scoped-VMEM default even with in+out double
    # buffering on v7x).  Keep tr a multiple of 8 when tiling; tiny inputs
    # use one full-extent block.
    elem_bytes = jnp.dtype(x2.dtype).itemsize
    target_block_bytes = 2 * 1024 * 1024
    tr_max = max(8, (target_block_bytes // (lanes * elem_bytes)) // 8 * 8)
    tr = rows if rows <= tr_max else tr_max
    grid = (pl.cdiv(rows, tr),)

    seed_arr = jnp.asarray([seed], dtype=jnp.int32)
    kernel = functools.partial(_dropout_double_kernel, p=float(p), lanes=lanes)

    out = pl.pallas_call(
        kernel,
        out_shape=jax.ShapeDtypeStruct(x2.shape, x2.dtype),
        grid_spec=pltpu.PrefetchScalarGridSpec(
            num_scalar_prefetch=1,
            grid=grid,
            in_specs=[pl.BlockSpec((tr, lanes), lambda i, seed: (i, 0))],
            out_specs=pl.BlockSpec((tr, lanes), lambda i, seed: (i, 0)),
        ),
        compiler_params=pltpu.CompilerParams(
            dimension_semantics=("parallel",)
        ),
    )(seed_arr, x2)

    out = out.reshape(-1)
    if pad:
        out = out[:n]
    return out.reshape(orig_shape)


if __name__ == "__main__":
    key = jax.random.PRNGKey(0)
    # NCHW input, like the torch_glow test would feed.
    x = jax.random.normal(key, (2, 4, 16, 16), dtype=jnp.float32)

    p = 0.5
    y = simple_dropout_module(x, seed=1234, p=p, training=True)
    y = jax.block_until_ready(y)

    # Sanity checks: every surviving element must equal (x + x) / (1 - p);
    # dropped elements must be exactly zero.
    expected_kept = (x + x) / (1.0 - p)
    kept_mask = y != 0.0
    assert y.shape == x.shape and y.dtype == x.dtype
    assert bool(
        jnp.all(jnp.where(kept_mask, jnp.abs(y - expected_kept) < 1e-5, True))
    )
    frac_kept = float(jnp.mean(kept_mask.astype(jnp.float32)))
    assert 0.3 < frac_kept < 0.7, f"unexpected keep fraction {frac_kept}"

    # Determinism: same seed -> identical mask.
    y2 = jax.block_until_ready(simple_dropout_module(x, seed=1234, p=p, training=True))
    assert bool(jnp.all(y == y2))

    # Exercise the padding path (flattened size not a multiple of 128).
    x_odd = jax.random.normal(jax.random.PRNGKey(1), (2, 3, 5, 7), dtype=jnp.float32)
    y_odd = jax.block_until_ready(simple_dropout_module(x_odd, seed=7, p=p, training=True))
    exp_odd = (x_odd + x_odd) / (1.0 - p)
    kept_odd = y_odd != 0.0
    assert y_odd.shape == x_odd.shape
    assert bool(jnp.all(jnp.where(kept_odd, jnp.abs(y_odd - exp_odd) < 1e-5, True)))

    # Exercise the tiled / multi-block path (rows > tr_max would need a huge
    # input; just verify a larger lane-divisible shape works end to end).
    x_big = jax.random.normal(jax.random.PRNGKey(2), (8, 8, 32, 32), dtype=jnp.float32)
    y_big = jax.block_until_ready(simple_dropout_module(x_big, seed=99, p=p, training=True))
    exp_big = (x_big + x_big) / (1.0 - p)
    kept_big = y_big != 0.0
    assert bool(jnp.all(jnp.where(kept_big, jnp.abs(y_big - exp_big) < 1e-4, True)))

    # Inference path: pure doubling (no kernel launch).
    y_eval = jax.block_until_ready(simple_dropout_module(x, seed=0, p=p, training=False))
    assert bool(jnp.all(jnp.abs(y_eval - (x + x)) < 1e-6))

    print("KERNEL_OK")
</pallas_src>

<mosaic_0001>
module attributes {stable_mosaic.version = 11 : i64} {
  func.func @_dropout_double_kernel(%arg0: i32, %arg1: memref<1xi32, #tpu.memory_space<smem>>, %arg2: memref<1x2048xf32, #tpu.memory_space<vmem>>, %arg3: memref<1x2048xf32, #tpu.memory_space<vmem>>) attributes {dimension_semantics = [#tpu.dimension_semantics<parallel>], iteration_bounds = array<i64: 1>, scalar_prefetch = 1 : i64, scratch_operands = 0 : i64, tpu.core_type = #tpu.core_type<tc>, window_params = [{transform_indices = @transform_0, window_bounds = array<i64: 1, 2048>}, {transform_indices = @transform_1, window_bounds = array<i64: 1, 2048>}]} {
    %c0 = arith.constant 0 : index
    %c0_0 = arith.constant 0 : index
    %0 = vector.load %arg2[%c0, %c0_0] : memref<1x2048xf32, #tpu.memory_space<vmem>>, vector<1x2048xf32>
    %1 = tpu.iota {dimensions = array<i32: 0>} : vector<1x2048xi32>
    %2 = tpu.iota {dimensions = array<i32: 1>} : vector<1x2048xi32>
    %c1_i32 = arith.constant 1 : i32
    %3 = arith.muli %arg0, %c1_i32 : i32
    %4 = vector.broadcast %3 : i32 to vector<1x2048xi32>
    %5 = arith.addi %4, %1 : vector<1x2048xi32>
    %c2048_i32 = arith.constant 2048 : i32
    %6 = vector.broadcast %c2048_i32 : i32 to vector<1x2048xi32>
    %7 = arith.muli %5, %6 : vector<1x2048xi32>
    %8 = arith.addi %7, %2 : vector<1x2048xi32>
    %c0_1 = arith.constant 0 : index
    %9 = memref.load %arg1[%c0_1] : memref<1xi32, #tpu.memory_space<smem>>
    %c-1640531527_i32 = arith.constant -1640531527 : i32
    %10 = vector.broadcast %c-1640531527_i32 : i32 to vector<1x2048xi32>
    %11 = arith.muli %8, %10 : vector<1x2048xi32>
    %c-2048144789_i32 = arith.constant -2048144789 : i32
    %12 = arith.muli %9, %c-2048144789_i32 : i32
    %13 = vector.broadcast %12 : i32 to vector<1x2048xi32>
    %14 = arith.addi %11, %13 : vector<1x2048xi32>
    %c1_i32_2 = arith.constant 1 : i32
    %15 = vector.broadcast %c1_i32_2 : i32 to vector<1x2048xi32>
    %16 = arith.addi %14, %15 : vector<1x2048xi32>
    %c16_i32 = arith.constant 16 : i32
    %17 = vector.broadcast %c16_i32 : i32 to vector<1x2048xi32>
    %18 = arith.shrui %16, %17 : vector<1x2048xi32>
    %19 = arith.xori %16, %18 : vector<1x2048xi32>
    %c2146121005_i32 = arith.constant 2146121005 : i32
    %20 = vector.broadcast %c2146121005_i32 : i32 to vector<1x2048xi32>
    %21 = arith.muli %19, %20 : vector<1x2048xi32>
    %c15_i32 = arith.constant 15 : i32
    %22 = vector.broadcast %c15_i32 : i32 to vector<1x2048xi32>
    %23 = arith.shrui %21, %22 : vector<1x2048xi32>
    %24 = arith.xori %21, %23 : vector<1x2048xi32>
    %c-2073254261_i32 = arith.constant -2073254261 : i32
    %25 = vector.broadcast %c-2073254261_i32 : i32 to vector<1x2048xi32>
    %26 = arith.muli %24, %25 : vector<1x2048xi32>
    %c16_i32_3 = arith.constant 16 : i32
    %27 = vector.broadcast %c16_i32_3 : i32 to vector<1x2048xi32>
    %28 = arith.shrui %26, %27 : vector<1x2048xi32>
    %29 = arith.xori %26, %28 : vector<1x2048xi32>
    %c-2147483648_i32 = arith.constant -2147483648 : i32
    %30 = vector.broadcast %c-2147483648_i32 : i32 to vector<1x2048xi32>
    %31 = arith.cmpi uge, %29, %30 : vector<1x2048xi32>
    %cst = arith.constant 4.000000e+00 : f32
    %32 = vector.broadcast %cst : f32 to vector<1x2048xf32>
    %33 = arith.mulf %0, %32 : vector<1x2048xf32>
    %cst_4 = arith.constant 0.000000e+00 : f32
    %34 = vector.broadcast %cst_4 : f32 to vector<1x2048xf32>
    %35 = arith.select %31, %33, %34 : vector<1x2048xi1>, vector<1x2048xf32>
    %c0_5 = arith.constant 0 : index
    %c0_6 = arith.constant 0 : index
    %36 = vector.load %arg3[%c0_5, %c0_6] : memref<1x2048xf32, #tpu.memory_space<vmem>>, vector<1x2048xf32>
    tpu.vector_store %arg3[%c0_5, %c0_6], %35 {strides = array<i32>} : memref<1x2048xf32, #tpu.memory_space<vmem>>, vector<1x2048xf32>,
    return
  }
  func.func @transform_0(%arg0: i32, %arg1: memref<1xi32, #tpu.memory_space<smem>>) -> (i32, i32) {
    %c0_i32 = arith.constant 0 : i32
    %c0_i32_0 = arith.constant 0 : i32
    return %arg0, %c0_i32 : i32, i32
  }
  func.func @transform_1(%arg0: i32, %arg1: memref<1xi32, #tpu.memory_space<smem>>) -> (i32, i32) {
    %c0_i32 = arith.constant 0 : i32
    %c0_i32_0 = arith.constant 0 : i32
    return %arg0, %c0_i32 : i32, i32
  }
}

</mosaic_0001>

<llo_original>
// kernel: tpu_custom_call.1
$region0: #{tpu_custom_call.1}
  #allocation0 [shape = 'u32[]', space=smem, size = 0x4, offset = 0x4, fixed_abs, tag = 'smem constant byte address 0x4 - core index']
  #allocation1 [shape = 'u32[72,128]{1,0:T(1,128)}', space=vmem, size = 0x9000, scoped, tag = 'internal scratch']
  #allocation2 [shape = 's32[1]{0}', space=sflag, size = 0x4, scoped, tag = 'scoped memory for tpu_custom_call.1']
  #allocation3 [shape = 's32[1]{0:T(128)S(6)}', space=smem, size = 0x200, scoped, tag = 'prefetched SMEM operand 0']
  %s0 = inlined_call_operand.<no memory space> [shape: s32[1], index: 0, kind: input, shape index: {}]
  %s1 = inlined_call_operand.hbm [shape: f32[1,2048], index: 1, kind: input, shape index: {}]
  %s2 = inlined_call_operand.hbm [shape: f32[1,2048], index: 2, kind: output, shape index: {}]
  %s3 = sld [smem:[#allocation0]]
  $region18: #{tpu_custom_call.1} parent=0
    _
  %s5 = ssub.s32 1, %s3
  %s6 = scalar_select 0, %s5, %s3
  %7 = sst [smem:[#allocation3]] %s0
  $region1: #{tpu_custom_call.1} parent=0
    #allocation4 [shape = 'u8[8192]{0}', space=vmem, size = 0x2000, scoped, tag = 'input window, operand 1, single buffered']
    #allocation5 [shape = 's32[1]{0}', space=sflag, size = 0x4, scoped, tag = 'scoped memory for tpu_custom_call.1']
    #allocation6 [shape = 's32[1]{0}', space=sflag, size = 0x4, scoped, tag = 'scoped memory for tpu_custom_call.1']
    #allocation7 [shape = 'u8[8192]{0}', space=vmem, size = 0x2000, scoped, tag = 'output window, operand 0, single buffered']
    %8 = vsyncpa [#allocation5], 0
    %9 = vsyncpa [#allocation6], 0
    // Predicated region
    $region2: #{tpu_custom_call.1} parent=1 // pred_check
      _
    $region3: #{tpu_custom_call.1} parent=1 // pred_check_branch
      %11 = sbr.rel (0) target = $region5
    $region4: #{tpu_custom_call.1} parent=1 // pred_region
      %13 = vsyncadd [#allocation5], 0
      %s15 = sshll.u32 %s1, 4
      %s16 = int_to_ptr.hbm [resolvable:$true] %s15
      %s17 = sshll.u32 [#allocation4], 4
      %s18 = int_to_ptr.vmem [resolvable:$true] %s17
      %20 = dma.hbm_to_vmem [thread:$0]  %s16, 256, %s18, [#allocation5]
    $region5: #{tpu_custom_call.1} parent=1 // pred_fallthru
      _
    // Predicated region
    $region6: #{tpu_custom_call.1} parent=1 // pred_check
      _
    $region7: #{tpu_custom_call.1} parent=1 // pred_check_branch
      %22 = sbr.rel (0) target = $region9
    $region8: #{tpu_custom_call.1} parent=1 // pred_region
      %24 = dma.done [#allocation5], 256
    $region9: #{tpu_custom_call.1} parent=1 // pred_fallthru
      _
    %v25 = vld [vmem:[#allocation4] sm:$0xff]
    %v26 = vld [vmem:[#allocation4 + $0x8] sm:$0xff]
    %v27 = vlaneseq
    %v28 = vshrl.u32 %v27, 7
    %v29 = vlaneseq
    %v30 = vand.u32 %v29, 127
    %v31 = vadd.s32 %v30, 128
    %v32 = vadd.s32 %v30, 256
    %v33 = vadd.s32 %v30, 384
    %v34 = vadd.s32 %v30, 512
    %v35 = vadd.s32 %v30, 640
    %v36 = vadd.s32 %v30, 768
    %v37 = vadd.s32 %v30, 896
    %v38 = vadd.s32 %v30, 1024
    %v39 = vadd.s32 %v30, 1152
    %v40 = vadd.s32 %v30, 1280
    %v41 = vadd.s32 %v30, 1408
    %v42 = vadd.s32 %v30, 1536
    %v43 = vadd.s32 %v30, 1664
    %v44 = vadd.s32 %v30, 1792
    %v45 = vadd.s32 %v30, 1920
    %v46 = vstv 0
    %v47 = vadd.s32 %v46, %v28
    %v48 = vmul.u32 %v47, 2048
    %v49 = vadd.s32 %v48, %v30
    %v50 = vadd.s32 %v48, %v31
    %v51 = vadd.s32 %v48, %v32
    %v52 = vadd.s32 %v48, %v33
    %v53 = vadd.s32 %v48, %v34
    %v54 = vadd.s32 %v48, %v35
    %v55 = vadd.s32 %v48, %v36
    %v56 = vadd.s32 %v48, %v37
    %v57 = vadd.s32 %v48, %v38
    %v58 = vadd.s32 %v48, %v39
    %v59 = vadd.s32 %v48, %v40
    %v60 = vadd.s32 %v48, %v41
    %v61 = vadd.s32 %v48, %v42
    %v62 = vadd.s32 %v48, %v43
    %v63 = vadd.s32 %v48, %v44
    %v64 = vadd.s32 %v48, %v45
    %s65 = sld [smem:[#allocation3]]
    %v66 = vmul.u32 %v49, 2654435769
    %v67 = vmul.u32 %v50, 2654435769
    %v68 = vmul.u32 %v51, 2654435769
    %v69 = vmul.u32 %v52, 2654435769
    %v70 = vmul.u32 %v53, 2654435769
    %v71 = vmul.u32 %v54, 2654435769
    %v72 = vmul.u32 %v55, 2654435769
    %v73 = vmul.u32 %v56, 2654435769
    %v74 = vmul.u32 %v57, 2654435769
    %v75 = vmul.u32 %v58, 2654435769
    %v76 = vmul.u32 %v59, 2654435769
    %v77 = vmul.u32 %v60, 2654435769
    %v78 = vmul.u32 %v61, 2654435769
    %v79 = vmul.u32 %v62, 2654435769
    %v80 = vmul.u32 %v63, 2654435769
    %v81 = vmul.u32 %v64, 2654435769
    %s82 = smul.u32 %s65, 2246822507
    %v83 = vstv %s82
    %v84 = vadd.s32 %v66, %v83
    %v85 = vadd.s32 %v67, %v83
    %v86 = vadd.s32 %v68, %v83
    %v87 = vadd.s32 %v69, %v83
    %v88 = vadd.s32 %v70, %v83
    %v89 = vadd.s32 %v71, %v83
    %v90 = vadd.s32 %v72, %v83
    %v91 = vadd.s32 %v73, %v83
    %v92 = vadd.s32 %v74, %v83
    %v93 = vadd.s32 %v75, %v83
    %v94 = vadd.s32 %v76, %v83
    %v95 = vadd.s32 %v77, %v83
    %v96 = vadd.s32 %v78, %v83
    %v97 = vadd.s32 %v79, %v83
    %v98 = vadd.s32 %v80, %v83
    %v99 = vadd.s32 %v81, %v83
    %v100 = vadd.s32 %v84, 1
    %v101 = vadd.s32 %v85, 1
    %v102 = vadd.s32 %v86, 1
    %v103 = vadd.s32 %v87, 1
    %v104 = vadd.s32 %v88, 1
    %v105 = vadd.s32 %v89, 1
    %v106 = vadd.s32 %v90, 1
    %v107 = vadd.s32 %v91, 1
    %v108 = vadd.s32 %v92, 1
    %v109 = vadd.s32 %v93, 1
    %v110 = vadd.s32 %v94, 1
    %v111 = vadd.s32 %v95, 1
    %v112 = vadd.s32 %v96, 1
    %v113 = vadd.s32 %v97, 1
    %v114 = vadd.s32 %v98, 1
    %v115 = vadd.s32 %v99, 1
    %v116 = vshrl.u32 %v100, 16
    %v117 = vshrl.u32 %v101, 16
    %v118 = vshrl.u32 %v102, 16
    %v119 = vshrl.u32 %v103, 16
    %v120 = vshrl.u32 %v104, 16
    %v121 = vshrl.u32 %v105, 16
    %v122 = vshrl.u32 %v106, 16
    %v123 = vshrl.u32 %v107, 16
    %v124 = vshrl.u32 %v108, 16
    %v125 = vshrl.u32 %v109, 16
    %v126 = vshrl.u32 %v110, 16
    %v127 = vshrl.u32 %v111, 16
    %v128 = vshrl.u32 %v112, 16
    %v129 = vshrl.u32 %v113, 16
    %v130 = vshrl.u32 %v114, 16
    %v131 = vshrl.u32 %v115, 16
    %v132 = vxor.u32 %v100, %v116
    %v133 = vxor.u32 %v101, %v117
    %v134 = vxor.u32 %v102, %v118
    %v135 = vxor.u32 %v103, %v119
    %v136 = vxor.u32 %v104, %v120
    %v137 = vxor.u32 %v105, %v121
    %v138 = vxor.u32 %v106, %v122
    %v139 = vxor.u32 %v107, %v123
    %v140 = vxor.u32 %v108, %v124
    %v141 = vxor.u32 %v109, %v125
    %v142 = vxor.u32 %v110, %v126
    %v143 = vxor.u32 %v111, %v127
    %v144 = vxor.u32 %v112, %v128
    %v145 = vxor.u32 %v113, %v129
    %v146 = vxor.u32 %v114, %v130
    %v147 = vxor.u32 %v115, %v131
    %v148 = vmul.u32 %v132, 2146121005
    %v149 = vmul.u32 %v133, 2146121005
    %v150 = vmul.u32 %v134, 2146121005
    %v151 = vmul.u32 %v135, 2146121005
    %v152 = vmul.u32 %v136, 2146121005
    %v153 = vmul.u32 %v137, 2146121005
    %v154 = vmul.u32 %v138, 2146121005
    %v155 = vmul.u32 %v139, 2146121005
    %v156 = vmul.u32 %v140, 2146121005
    %v157 = vmul.u32 %v141, 2146121005
    %v158 = vmul.u32 %v142, 2146121005
    %v159 = vmul.u32 %v143, 2146121005
    %v160 = vmul.u32 %v144, 2146121005
    %v161 = vmul.u32 %v145, 2146121005
    %v162 = vmul.u32 %v146, 2146121005
    %v163 = vmul.u32 %v147, 2146121005
    %v164 = vshrl.u32 %v148, 15
    %v165 = vshrl.u32 %v149, 15
    %v166 = vshrl.u32 %v150, 15
    %v167 = vshrl.u32 %v151, 15
    %v168 = vshrl.u32 %v152, 15
    %v169 = vshrl.u32 %v153, 15
    %v170 = vshrl.u32 %v154, 15
    %v171 = vshrl.u32 %v155, 15
    %v172 = vshrl.u32 %v156, 15
    %v173 = vshrl.u32 %v157, 15
    %v174 = vshrl.u32 %v158, 15
    %v175 = vshrl.u32 %v159, 15
    %v176 = vshrl.u32 %v160, 15
    %v177 = vshrl.u32 %v161, 15
    %v178 = vshrl.u32 %v162, 15
    %v179 = vshrl.u32 %v163, 15
    %v180 = vxor.u32 %v148, %v164
    %v181 = vxor.u32 %v149, %v165
    %v182 = vxor.u32 %v150, %v166
    %v183 = vxor.u32 %v151, %v167
    %v184 = vxor.u32 %v152, %v168
    %v185 = vxor.u32 %v153, %v169
    %v186 = vxor.u32 %v154, %v170
    %v187 = vxor.u32 %v155, %v171
    %v188 = vxor.u32 %v156, %v172
    %v189 = vxor.u32 %v157, %v173
    %v190 = vxor.u32 %v158, %v174
    %v191 = vxor.u32 %v159, %v175
    %v192 = vxor.u32 %v160, %v176
    %v193 = vxor.u32 %v161, %v177
    %v194 = vxor.u32 %v162, %v178
    %v195 = vxor.u32 %v163, %v179
    %v196 = vmul.u32 %v180, 2221713035
    %v197 = vmul.u32 %v181, 2221713035
    %v198 = vmul.u32 %v182, 2221713035
    %v199 = vmul.u32 %v183, 2221713035
    %v200 = vmul.u32 %v184, 2221713035
    %v201 = vmul.u32 %v185, 2221713035
    %v202 = vmul.u32 %v186, 2221713035
    %v203 = vmul.u32 %v187, 2221713035
    %v204 = vmul.u32 %v188, 2221713035
    %v205 = vmul.u32 %v189, 2221713035
    %v206 = vmul.u32 %v190, 2221713035
    %v207 = vmul.u32 %v191, 2221713035
    %v208 = vmul.u32 %v192, 2221713035
    %v209 = vmul.u32 %v193, 2221713035
    %v210 = vmul.u32 %v194, 2221713035
    %v211 = vmul.u32 %v195, 2221713035
    %v212 = vshrl.u32 %v196, 16
    %v213 = vshrl.u32 %v197, 16
    %v214 = vshrl.u32 %v198, 16
    %v215 = vshrl.u32 %v199, 16
    %v216 = vshrl.u32 %v200, 16
    %v217 = vshrl.u32 %v201, 16
    %v218 = vshrl.u32 %v202, 16
    %v219 = vshrl.u32 %v203, 16
    %v220 = vshrl.u32 %v204, 16
    %v221 = vshrl.u32 %v205, 16
    %v222 = vshrl.u32 %v206, 16
    %v223 = vshrl.u32 %v207, 16
    %v224 = vshrl.u32 %v208, 16
    %v225 = vshrl.u32 %v209, 16
    %v226 = vshrl.u32 %v210, 16
    %v227 = vshrl.u32 %v211, 16
    %v228 = vxor.u32 %v196, %v212
    %v229 = vxor.u32 %v197, %v213
    %v230 = vxor.u32 %v198, %v214
    %v231 = vxor.u32 %v199, %v215
    %v232 = vxor.u32 %v200, %v216
    %v233 = vxor.u32 %v201, %v217
    %v234 = vxor.u32 %v202, %v218
    %v235 = vxor.u32 %v203, %v219
    %v236 = vxor.u32 %v204, %v220
    %v237 = vxor.u32 %v205, %v221
    %v238 = vxor.u32 %v206, %v222
    %v239 = vxor.u32 %v207, %v223
    %v240 = vxor.u32 %v208, %v224
    %v241 = vxor.u32 %v209, %v225
    %v242 = vxor.u32 %v210, %v226
    %v243 = vxor.u32 %v211, %v227
    %v244 = vadd.s32 %v228, 2147483648
    %vm246 = vcmp.ge.s32.totalorder %v244, 0
    %v247 = vadd.s32 %v229, 2147483648
    %vm249 = vcmp.ge.s32.totalorder %v247, 0
    %v250 = vadd.s32 %v230, 2147483648
    %vm252 = vcmp.ge.s32.totalorder %v250, 0
    %v253 = vadd.s32 %v231, 2147483648
    %vm255 = vcmp.ge.s32.totalorder %v253, 0
    %v256 = vadd.s32 %v232, 2147483648
    %vm258 = vcmp.ge.s32.totalorder %v256, 0
    %v259 = vadd.s32 %v233, 2147483648
    %vm261 = vcmp.ge.s32.totalorder %v259, 0
    %v262 = vadd.s32 %v234, 2147483648
    %vm264 = vcmp.ge.s32.totalorder %v262, 0
    %v265 = vadd.s32 %v235, 2147483648
    %vm267 = vcmp.ge.s32.totalorder %v265, 0
    %v268 = vadd.s32 %v236, 2147483648
    %vm270 = vcmp.ge.s32.totalorder %v268, 0
    %v271 = vadd.s32 %v237, 2147483648
    %vm273 = vcmp.ge.s32.totalorder %v271, 0
    %v274 = vadd.s32 %v238, 2147483648
    %vm276 = vcmp.ge.s32.totalorder %v274, 0
    %v277 = vadd.s32 %v239, 2147483648
    %vm279 = vcmp.ge.s32.totalorder %v277, 0
    %v280 = vadd.s32 %v240, 2147483648
    %vm282 = vcmp.ge.s32.totalorder %v280, 0
    %v283 = vadd.s32 %v241, 2147483648
    %vm285 = vcmp.ge.s32.totalorder %v283, 0
    %v286 = vadd.s32 %v242, 2147483648
    %vm288 = vcmp.ge.s32.totalorder %v286, 0
    %v289 = vadd.s32 %v243, 2147483648
    %vm291 = vcmp.ge.s32.totalorder %v289, 0
    %v292 = vmul.f32 %v25, 4.0
    %v293 = vmul.f32 %v26, 4.0
    %v296 = vperm.slane %v292, 0
    %v297 = vperm.slane %v292, 1
    %v298 = vperm.slane %v292, 2
    %v299 = vperm.slane %v292, 3
    %v300 = vperm.slane %v292, 4
    %v301 = vperm.slane %v292, 5
    %v302 = vperm.slane %v292, 6
    %v303 = vperm.slane %v292, 7
    %v304 = vperm.slane %v293, 0
    %v305 = vperm.slane %v293, 1
    %v306 = vperm.slane %v293, 2
    %v307 = vperm.slane %v293, 3
    %v308 = vperm.slane %v293, 4
    %v309 = vperm.slane %v293, 5
    %v310 = vperm.slane %v293, 6
    %v311 = vperm.slane %v293, 7
    %v328 = vsel %vm246, %v296, 0.0
    %v329 = vsel %vm249, %v297, 0.0
    %v330 = vsel %vm252, %v298, 0.0
    %v331 = vsel %vm255, %v299, 0.0
    %v332 = vsel %vm258, %v300, 0.0
    %v333 = vsel %vm261, %v301, 0.0
    %v334 = vsel %vm264, %v302, 0.0
    %v335 = vsel %vm267, %v303, 0.0
    %v336 = vsel %vm270, %v304, 0.0
    %v337 = vsel %vm273, %v305, 0.0
    %v338 = vsel %vm276, %v306, 0.0
    %v339 = vsel %vm279, %v307, 0.0
    %v340 = vsel %vm282, %v308, 0.0
    %v341 = vsel %vm285, %v309, 0.0
    %v342 = vsel %vm288, %v310, 0.0
    %v343 = vsel %vm291, %v311, 0.0
    %v360 = vrot.slane %v329, 7
    %v361 = vrot.slane %v330, 6
    %v362 = vrot.slane %v331, 5
    %v363 = vrot.slane %v332, 4
    %v364 = vrot.slane %v333, 3
    %v365 = vrot.slane %v334, 2
    %v366 = vrot.slane %v335, 1
    %v367 = vrot.slane %v337, 7
    %v368 = vrot.slane %v338, 6
    %v369 = vrot.slane %v339, 5
    %v370 = vrot.slane %v340, 4
    %v371 = vrot.slane %v341, 3
    %v372 = vrot.slane %v342, 2
    %v373 = vrot.slane %v343, 1
    %vm374 = vcmask 1040384
    %v375 = vsel %vm374, %v328, %v360
    %vm376 = vcmask 1042434
    %v377 = vsel %vm376, %v361, %v362
    %vm378 = vcmask 1041408
    %v379 = vsel %vm378, %v375, %v377
    %vm380 = vcmask 1044484
    %v381 = vsel %vm380, %v363, %v364
    %vm382 = vcmask 1046534
    %v383 = vsel %vm382, %v365, %v366
    %vm384 = vcmask 1045508
    %v385 = vsel %vm384, %v381, %v383
    %vm386 = vcmask 1043456
    %v387 = vsel %vm386, %v379, %v385
    %v388 = vsel %vm374, %v336, %v367
    %v389 = vsel %vm376, %v368, %v369
    %v390 = vsel %vm378, %v388, %v389
    %v391 = vsel %vm380, %v370, %v371
    %v392 = vsel %vm382, %v372, %v373
    %v393 = vsel %vm384, %v391, %v392
    %v394 = vsel %vm386, %v390, %v393
    %397 = vst [vmem:[#allocation7] sm:$0xff] %v387
    %398 = vst [vmem:[#allocation7 + $0x8] sm:$0xff] %v394
    // Predicated region
    $region10: #{tpu_custom_call.1} parent=1 // pred_check
      _
    $region11: #{tpu_custom_call.1} parent=1 // pred_check_branch
      %400 = sbr.rel (0) target = $region13
    $region12: #{tpu_custom_call.1} parent=1 // pred_region
      %402 = vsyncadd [#allocation6], 0
      %s404 = sshll.u32 [#allocation7], 4
      %s405 = int_to_ptr.vmem [resolvable:$true] %s404
      %s406 = sshll.u32 %s2, 4
      %s407 = int_to_ptr.hbm [resolvable:$true] %s406
      %409 = dma.vmem_to_hbm [thread:$0]  %s405, 256, %s407, [#allocation6]
    $region13: #{tpu_custom_call.1} parent=1 // pred_fallthru
      _
    // Predicated region
    $region14: #{tpu_custom_call.1} parent=1 // pred_check
      _
    $region15: #{tpu_custom_call.1} parent=1 // pred_check_branch
      %411 = sbr.rel (0) target = $region17
    $region16: #{tpu_custom_call.1} parent=1 // pred_region
      %413 = dma.done [#allocation6], 256
    $region17: #{tpu_custom_call.1} parent=1 // pred_fallthru
      _
    %414 = vsyncpa [#allocation5], 1
    %415 = vsyncpa [#allocation6], 1

</llo_original>
